<compile_context>
chip_gen: v6e
topology: v6e:2x2x1
jax: 0.10.0
libtpu: 0.0.40
codegen_flags: <defaults>
</compile_context>

<pallas_src>
import numpy as np
import jax
import jax.numpy as jnp
from jax import lax
from jax.experimental import pallas as pl
from jax.experimental.pallas import tpu as pltpu


_TARGET_IN_BLOCK = 4 << 20     # ~4 MiB of input per grid step
_VMEM_BUDGET = 24 << 20        # double-buffered in+out blocks must fit here
_VMEM_LIMIT = 32 << 20         # scoped-VMEM limit passed to Mosaic


def _sorting_network(n):
    """Batcher odd-even mergesort for n inputs (pad-to-pow2, filtered to < n).

    Comparators touching indices >= n are dropped; with virtual +inf padding
    they are no-ops, so the filtered network sorts any n.  Verified via the
    0-1 principle for small n, with an odd-even-transposition fallback."""
    if n <= 1:
        return []
    N = 1
    while N < n:
        N *= 2
    comps = []
    p = 1
    while p < N:
        k = p
        while k >= 1:
            for j in range(k % p, N - k, 2 * k):
                for i in range(min(k, N - j - k)):
                    if (i + j) // (2 * p) == (i + j + k) // (2 * p):
                        a, b = i + j, i + j + k
                        if b < n:
                            comps.append((a, b))
            k //= 2
        p *= 2
    if n <= 12:  # exhaustive 0-1 check at build time (static, cheap)
        for bits in range(1 << n):
            v = [(bits >> i) & 1 for i in range(n)]
            for a, b in comps:
                if v[a] > v[b]:
                    v[a], v[b] = v[b], v[a]
            if any(v[i] > v[i + 1] for i in range(n - 1)):
                return [(i, i + 1)
                        for s in range(n)
                        for i in range(s % 2, n - 1, 2)]
    return comps


def _interp_table(n, n_percentiles, min_pct, max_pct):
    fracs = np.linspace(min_pct / 100.0, max_pct / 100.0, n_percentiles)
    table = []
    for frac in fracs:
        idx_f = float(frac) * (n - 1)
        lo = int(np.floor(idx_f))
        hi = int(np.ceil(idx_f))
        w = float(idx_f - lo)
        table.append((lo, hi, w))
    return table


def _make_kernel(n, d, interp, comps, bt, sub, lc, out_dtype):
    n_lane = d // lc            # static lane chunks inside the block
    n_full = bt // sub          # full sublane groups
    tail = bt - n_full * sub    # only nonzero when bt == b and b % sub != 0

    def process_group(x_ref, o_ref, sub0, sub_sz):
        s_idx = pl.ds(sub0, sub_sz)
        for c in range(n_lane):                       # static, 128-aligned
            lane0 = c * lc
            rows = [x_ref[s_idx, pl.ds(i * d + lane0, lc)] for i in range(n)]
            # Batcher network: vectorized compare-exchange on dense slabs.
            for a, b in comps:
                lo_v = jnp.minimum(rows[a], rows[b])
                hi_v = jnp.maximum(rows[a], rows[b])
                rows[a], rows[b] = lo_v, hi_v
            o_lane = pl.ds(lane0, lc)
            for p, (lo, hi, w) in enumerate(interp):
                if hi == lo:
                    val = rows[lo]
                else:  # interpolate in f32 (exact no-op for f32 inputs)
                    val = (rows[lo].astype(jnp.float32) * (1.0 - w)
                           + rows[hi].astype(jnp.float32) * w)
                o_ref[p, s_idx, o_lane] = val.astype(out_dtype)

    def kernel(x_ref, o_ref):
        # x_ref: (bt, n*d)   o_ref: (n_percentiles, bt, d)
        if n_full > 0:
            if n_full <= 4:                           # small: fully static
                for s in range(n_full):
                    process_group(x_ref, o_ref, s * sub, sub)
            else:                                     # bounded code size
                def body(s, carry):
                    process_group(x_ref, o_ref,
                                  pl.multiple_of(s * sub, sub), sub)
                    return carry
                lax.fori_loop(0, n_full, body, 0)
        if tail > 0:
            process_group(x_ref, o_ref, n_full * sub, tail)

    return kernel


def _percentiles_jax(x, interp):
    """Pure-JAX fallback for small or lane-unaligned inputs."""
    b, n, d = x.shape
    xs = jnp.sort(jnp.transpose(x, (0, 2, 1)), axis=2)   # [b, d, n]
    cols = []
    for lo, hi, w in interp:
        if hi == lo:
            cols.append(xs[:, :, lo])
        else:
            cols.append(xs[:, :, lo] * (1.0 - w) + xs[:, :, hi] * w)
    return jnp.stack(cols, axis=2).reshape(b, d * len(interp))


def percentile_aggregator(x, n_percentiles=10, min_pct=5, max_pct=95):
    """x: [batch, num_tiles, embed_dim] -> [batch, embed_dim * n_percentiles]."""
    b, n, d = x.shape
    p_cnt = n_percentiles
    interp = _interp_table(n, p_cnt, min_pct, max_pct)

    itemsize = int(x.dtype.itemsize)
    sub = 8 * max(1, 4 // itemsize)      # 8 f32 / 16 bf16 / 32 int8 rows per vreg
    lc = 256 if d % 256 == 0 else 128    # lane-chunk width inside the kernel

    # Small-input / unaligned-d bypass (avoids padding and launch overhead where
    # the Pallas path can never win).
    if d % 128 != 0 or b * d < sub * 128 or n < 1:
        return _percentiles_jax(x, interp)

    row_in = n * d * itemsize
    row_out = p_cnt * d * itemsize

    # Batch-tile size: ~4 MiB input blocks, >= 2 grid steps when possible (v7x
    # megacore), double-buffered working set under the VMEM budget.
    if b % sub == 0:
        bt = min(b, max(sub, (_TARGET_IN_BLOCK // row_in) // sub * sub))
        if b >= 2 * sub:
            bt = min(bt, max(sub, (b // 2) // sub * sub))
    else:
        bt = b
    while bt > sub and 2 * bt * (row_in + row_out) > _VMEM_BUDGET:
        bt = max(sub, (bt // 2) // sub * sub)
    if 2 * bt * (row_in + row_out) > _VMEM_BUDGET:
        return _percentiles_jax(x, interp)   # pathologically wide rows

    grid = (pl.cdiv(b, bt),)
    comps = _sorting_network(n)
    kernel = _make_kernel(n, d, interp, comps, bt, sub, lc, x.dtype)

    # Free view: tile-row i of a batch row is the contiguous lane slice
    # [i*d, (i+1)*d) — no transpose, no padding, no extra HBM pass.
    x2 = x.reshape(b, n * d)

    out = pl.pallas_call(
        kernel,
        out_shape=jax.ShapeDtypeStruct((p_cnt, b, d), x.dtype),
        grid=grid,
        in_specs=[pl.BlockSpec((bt, n * d), lambda i: (i, 0))],
        out_specs=pl.BlockSpec((p_cnt, bt, d), lambda i: (0, i, 0)),
        compiler_params=pltpu.CompilerParams(
            dimension_semantics=("parallel",),
            vmem_limit_bytes=_VMEM_LIMIT),
    )(x2)

    # [P, b, d] -> [b, d, P] -> [b, d*P]  (dim-major, percentile-minor — the
    # torch concat order).  Single small permute on the result; the stride-P
    # lane interleave has no efficient in-kernel store pattern.
    return jnp.transpose(out, (1, 2, 0)).reshape(b, d * p_cnt)


def _reference(x, n_percentiles=10, min_pct=5, max_pct=95):
    # Pure-JAX reference mirroring the torch forward.
    b, n, d = x.shape
    fracs = np.linspace(min_pct / 100.0, max_pct / 100.0, n_percentiles)
    xs = jnp.sort(jnp.transpose(x, (0, 2, 1)), axis=2)   # [b, d, n]
    cols = []
    for frac in fracs:
        idx_f = float(frac) * (n - 1)
        lo = int(np.floor(idx_f))
        hi = int(np.ceil(idx_f))
        w = float(idx_f - lo)
        cols.append(xs[:, :, lo] * (1.0 - w) + xs[:, :, hi] * w)
    return jnp.stack(cols, axis=2).reshape(b, d * n_percentiles)


if __name__ == "__main__":
    # embed_dim=256 is the module default; batch=16 exercises the Pallas fast
    # path with a 2-step parallel grid (both v7x TensorCores get work).
    batch, num_tiles, embed_dim = 16, 8, 256
    n_percentiles = 10

    key = jax.random.PRNGKey(0)
    x = jax.random.normal(key, (batch, num_tiles, embed_dim), dtype=jnp.float32)

    out = percentile_aggregator(x, n_percentiles=n_percentiles)
    out = jax.block_until_ready(out)

    ref = _reference(x, n_percentiles=n_percentiles)
    assert out.shape == (batch, embed_dim * n_percentiles), out.shape
    np.testing.assert_allclose(np.asarray(out), np.asarray(ref), rtol=1e-5, atol=1e-5)

    print("KERNEL_OK")
</pallas_src>

<mosaic_0001>
module attributes {stable_mosaic.version = 11 : i64} {
  func.func @kernel(%arg0: i32, %arg1: memref<8x2048xf32, #tpu.memory_space<vmem>>, %arg2: memref<10x8x256xf32, #tpu.memory_space<vmem>>) attributes {dimension_semantics = [#tpu.dimension_semantics<parallel>], iteration_bounds = array<i64: 2>, scalar_prefetch = 0 : i64, scratch_operands = 0 : i64, tpu.core_type = #tpu.core_type<tc>, window_params = [{transform_indices = @transform_0, window_bounds = array<i64: 8, 2048>}, {transform_indices = @transform_1, window_bounds = array<i64: 10, 8, 256>}]} {
    %c0 = arith.constant 0 : index
    %c0_0 = arith.constant 0 : index
    %0 = vector.load %arg1[%c0, %c0_0] : memref<8x2048xf32, #tpu.memory_space<vmem>>, vector<8x256xf32>
    %c0_1 = arith.constant 0 : index
    %c256 = arith.constant 256 : index
    %1 = vector.load %arg1[%c0_1, %c256] : memref<8x2048xf32, #tpu.memory_space<vmem>>, vector<8x256xf32>
    %c0_2 = arith.constant 0 : index
    %c512 = arith.constant 512 : index
    %2 = vector.load %arg1[%c0_2, %c512] : memref<8x2048xf32, #tpu.memory_space<vmem>>, vector<8x256xf32>
    %c0_3 = arith.constant 0 : index
    %c768 = arith.constant 768 : index
    %3 = vector.load %arg1[%c0_3, %c768] : memref<8x2048xf32, #tpu.memory_space<vmem>>, vector<8x256xf32>
    %c0_4 = arith.constant 0 : index
    %c1024 = arith.constant 1024 : index
    %4 = vector.load %arg1[%c0_4, %c1024] : memref<8x2048xf32, #tpu.memory_space<vmem>>, vector<8x256xf32>
    %c0_5 = arith.constant 0 : index
    %c1280 = arith.constant 1280 : index
    %5 = vector.load %arg1[%c0_5, %c1280] : memref<8x2048xf32, #tpu.memory_space<vmem>>, vector<8x256xf32>
    %c0_6 = arith.constant 0 : index
    %c1536 = arith.constant 1536 : index
    %6 = vector.load %arg1[%c0_6, %c1536] : memref<8x2048xf32, #tpu.memory_space<vmem>>, vector<8x256xf32>
    %c0_7 = arith.constant 0 : index
    %c1792 = arith.constant 1792 : index
    %7 = vector.load %arg1[%c0_7, %c1792] : memref<8x2048xf32, #tpu.memory_space<vmem>>, vector<8x256xf32>
    %8 = arith.minimumf %0, %1 : vector<8x256xf32>
    %9 = arith.maximumf %0, %1 : vector<8x256xf32>
    %10 = arith.minimumf %2, %3 : vector<8x256xf32>
    %11 = arith.maximumf %2, %3 : vector<8x256xf32>
    %12 = arith.minimumf %4, %5 : vector<8x256xf32>
    %13 = arith.maximumf %4, %5 : vector<8x256xf32>
    %14 = arith.minimumf %6, %7 : vector<8x256xf32>
    %15 = arith.maximumf %6, %7 : vector<8x256xf32>
    %16 = arith.minimumf %8, %10 : vector<8x256xf32>
    %17 = arith.maximumf %8, %10 : vector<8x256xf32>
    %18 = arith.minimumf %9, %11 : vector<8x256xf32>
    %19 = arith.maximumf %9, %11 : vector<8x256xf32>
    %20 = arith.minimumf %12, %14 : vector<8x256xf32>
    %21 = arith.maximumf %12, %14 : vector<8x256xf32>
    %22 = arith.minimumf %13, %15 : vector<8x256xf32>
    %23 = arith.maximumf %13, %15 : vector<8x256xf32>
    %24 = arith.minimumf %18, %17 : vector<8x256xf32>
    %25 = arith.maximumf %18, %17 : vector<8x256xf32>
    %26 = arith.minimumf %22, %21 : vector<8x256xf32>
    %27 = arith.maximumf %22, %21 : vector<8x256xf32>
    %28 = arith.minimumf %16, %20 : vector<8x256xf32>
    %29 = arith.maximumf %16, %20 : vector<8x256xf32>
    %30 = arith.minimumf %24, %26 : vector<8x256xf32>
    %31 = arith.maximumf %24, %26 : vector<8x256xf32>
    %32 = arith.minimumf %25, %27 : vector<8x256xf32>
    %33 = arith.maximumf %25, %27 : vector<8x256xf32>
    %34 = arith.minimumf %19, %23 : vector<8x256xf32>
    %35 = arith.maximumf %19, %23 : vector<8x256xf32>
    %36 = arith.minimumf %32, %29 : vector<8x256xf32>
    %37 = arith.maximumf %32, %29 : vector<8x256xf32>
    %38 = arith.minimumf %34, %31 : vector<8x256xf32>
    %39 = arith.maximumf %34, %31 : vector<8x256xf32>
    %40 = arith.minimumf %30, %36 : vector<8x256xf32>
    %41 = arith.maximumf %30, %36 : vector<8x256xf32>
    %42 = arith.minimumf %38, %37 : vector<8x256xf32>
    %43 = arith.maximumf %38, %37 : vector<8x256xf32>
    %44 = arith.minimumf %39, %33 : vector<8x256xf32>
    %45 = arith.maximumf %39, %33 : vector<8x256xf32>
    %cst = arith.constant 6.500000e-01 : f32
    %46 = vector.broadcast %cst : f32 to vector<8x256xf32>
    %47 = arith.mulf %28, %46 : vector<8x256xf32>
    %cst_8 = arith.constant 3.500000e-01 : f32
    %48 = vector.broadcast %cst_8 : f32 to vector<8x256xf32>
    %49 = arith.mulf %40, %48 : vector<8x256xf32>
    %50 = arith.addf %47, %49 : vector<8x256xf32>
    %c0_9 = arith.constant 0 : index
    %c0_10 = arith.constant 0 : index
    %c0_11 = arith.constant 0 : index
    %51 = vector.load %arg2[%c0_9, %c0_10, %c0_11] : memref<10x8x256xf32, #tpu.memory_space<vmem>>, vector<1x8x256xf32>
    %52 = vector.shape_cast %51 : vector<1x8x256xf32> to vector<8x256xf32>
    %53 = vector.shape_cast %50 : vector<8x256xf32> to vector<1x8x256xf32>
    tpu.vector_store %arg2[%c0_9, %c0_10, %c0_11], %53 {strides = array<i32>} : memref<10x8x256xf32, #tpu.memory_space<vmem>>, vector<1x8x256xf32>,
    %cst_12 = arith.constant 0.949999988 : f32
    %54 = vector.broadcast %cst_12 : f32 to vector<8x256xf32>
    %55 = arith.mulf %40, %54 : vector<8x256xf32>
    %cst_13 = arith.constant 5.000000e-02 : f32
    %56 = vector.broadcast %cst_13 : f32 to vector<8x256xf32>
    %57 = arith.mulf %41, %56 : vector<8x256xf32>
    %58 = arith.addf %55, %57 : vector<8x256xf32>
    %c1 = arith.constant 1 : index
    %c0_14 = arith.constant 0 : index
    %c0_15 = arith.constant 0 : index
    %59 = vector.load %arg2[%c1, %c0_14, %c0_15] : memref<10x8x256xf32, #tpu.memory_space<vmem>>, vector<1x8x256xf32>
    %60 = vector.shape_cast %59 : vector<1x8x256xf32> to vector<8x256xf32>
    %61 = vector.shape_cast %58 : vector<8x256xf32> to vector<1x8x256xf32>
    tpu.vector_store %arg2[%c1, %c0_14, %c0_15], %61 {strides = array<i32>} : memref<10x8x256xf32, #tpu.memory_space<vmem>>, vector<1x8x256xf32>,
    %cst_16 = arith.constant 2.500000e-01 : f32
    %62 = vector.broadcast %cst_16 : f32 to vector<8x256xf32>
    %63 = arith.mulf %40, %62 : vector<8x256xf32>
    %cst_17 = arith.constant 7.500000e-01 : f32
    %64 = vector.broadcast %cst_17 : f32 to vector<8x256xf32>
    %65 = arith.mulf %41, %64 : vector<8x256xf32>
    %66 = arith.addf %63, %65 : vector<8x256xf32>
    %c2 = arith.constant 2 : index
    %c0_18 = arith.constant 0 : index
    %c0_19 = arith.constant 0 : index
    %67 = vector.load %arg2[%c2, %c0_18, %c0_19] : memref<10x8x256xf32, #tpu.memory_space<vmem>>, vector<1x8x256xf32>
    %68 = vector.shape_cast %67 : vector<1x8x256xf32> to vector<8x256xf32>
    %69 = vector.shape_cast %66 : vector<8x256xf32> to vector<1x8x256xf32>
    tpu.vector_store %arg2[%c2, %c0_18, %c0_19], %69 {strides = array<i32>} : memref<10x8x256xf32, #tpu.memory_space<vmem>>, vector<1x8x256xf32>,
    %cst_20 = arith.constant 5.500000e-01 : f32
    %70 = vector.broadcast %cst_20 : f32 to vector<8x256xf32>
    %71 = arith.mulf %41, %70 : vector<8x256xf32>
    %cst_21 = arith.constant 4.500000e-01 : f32
    %72 = vector.broadcast %cst_21 : f32 to vector<8x256xf32>
    %73 = arith.mulf %42, %72 : vector<8x256xf32>
    %74 = arith.addf %71, %73 : vector<8x256xf32>
    %c3 = arith.constant 3 : index
    %c0_22 = arith.constant 0 : index
    %c0_23 = arith.constant 0 : index
    %75 = vector.load %arg2[%c3, %c0_22, %c0_23] : memref<10x8x256xf32, #tpu.memory_space<vmem>>, vector<1x8x256xf32>
    %76 = vector.shape_cast %75 : vector<1x8x256xf32> to vector<8x256xf32>
    %77 = vector.shape_cast %74 : vector<8x256xf32> to vector<1x8x256xf32>
    tpu.vector_store %arg2[%c3, %c0_22, %c0_23], %77 {strides = array<i32>} : memref<10x8x256xf32, #tpu.memory_space<vmem>>, vector<1x8x256xf32>,
    %cst_24 = arith.constant 8.500000e-01 : f32
    %78 = vector.broadcast %cst_24 : f32 to vector<8x256xf32>
    %79 = arith.mulf %42, %78 : vector<8x256xf32>
    %cst_25 = arith.constant 1.500000e-01 : f32
    %80 = vector.broadcast %cst_25 : f32 to vector<8x256xf32>
    %81 = arith.mulf %43, %80 : vector<8x256xf32>
    %82 = arith.addf %79, %81 : vector<8x256xf32>
    %c4 = arith.constant 4 : index
    %c0_26 = arith.constant 0 : index
    %c0_27 = arith.constant 0 : index
    %83 = vector.load %arg2[%c4, %c0_26, %c0_27] : memref<10x8x256xf32, #tpu.memory_space<vmem>>, vector<1x8x256xf32>
    %84 = vector.shape_cast %83 : vector<1x8x256xf32> to vector<8x256xf32>
    %85 = vector.shape_cast %82 : vector<8x256xf32> to vector<1x8x256xf32>
    tpu.vector_store %arg2[%c4, %c0_26, %c0_27], %85 {strides = array<i32>} : memref<10x8x256xf32, #tpu.memory_space<vmem>>, vector<1x8x256xf32>,
    %cst_28 = arith.constant 1.500000e-01 : f32
    %86 = vector.broadcast %cst_28 : f32 to vector<8x256xf32>
    %87 = arith.mulf %42, %86 : vector<8x256xf32>
    %cst_29 = arith.constant 8.500000e-01 : f32
    %88 = vector.broadcast %cst_29 : f32 to vector<8x256xf32>
    %89 = arith.mulf %43, %88 : vector<8x256xf32>
    %90 = arith.addf %87, %89 : vector<8x256xf32>
    %c5 = arith.constant 5 : index
    %c0_30 = arith.constant 0 : index
    %c0_31 = arith.constant 0 : index
    %91 = vector.load %arg2[%c5, %c0_30, %c0_31] : memref<10x8x256xf32, #tpu.memory_space<vmem>>, vector<1x8x256xf32>
    %92 = vector.shape_cast %91 : vector<1x8x256xf32> to vector<8x256xf32>
    %93 = vector.shape_cast %90 : vector<8x256xf32> to vector<1x8x256xf32>
    tpu.vector_store %arg2[%c5, %c0_30, %c0_31], %93 {strides = array<i32>} : memref<10x8x256xf32, #tpu.memory_space<vmem>>, vector<1x8x256xf32>,
    %cst_32 = arith.constant 4.500000e-01 : f32
    %94 = vector.broadcast %cst_32 : f32 to vector<8x256xf32>
    %95 = arith.mulf %43, %94 : vector<8x256xf32>
    %cst_33 = arith.constant 5.500000e-01 : f32
    %96 = vector.broadcast %cst_33 : f32 to vector<8x256xf32>
    %97 = arith.mulf %44, %96 : vector<8x256xf32>
    %98 = arith.addf %95, %97 : vector<8x256xf32>
    %c6 = arith.constant 6 : index
    %c0_34 = arith.constant 0 : index
    %c0_35 = arith.constant 0 : index
    %99 = vector.load %arg2[%c6, %c0_34, %c0_35] : memref<10x8x256xf32, #tpu.memory_space<vmem>>, vector<1x8x256xf32>
    %100 = vector.shape_cast %99 : vector<1x8x256xf32> to vector<8x256xf32>
    %101 = vector.shape_cast %98 : vector<8x256xf32> to vector<1x8x256xf32>
    tpu.vector_store %arg2[%c6, %c0_34, %c0_35], %101 {strides = array<i32>} : memref<10x8x256xf32, #tpu.memory_space<vmem>>, vector<1x8x256xf32>,
    %cst_36 = arith.constant 7.500000e-01 : f32
    %102 = vector.broadcast %cst_36 : f32 to vector<8x256xf32>
    %103 = arith.mulf %44, %102 : vector<8x256xf32>
    %cst_37 = arith.constant 2.500000e-01 : f32
    %104 = vector.broadcast %cst_37 : f32 to vector<8x256xf32>
    %105 = arith.mulf %45, %104 : vector<8x256xf32>
    %106 = arith.addf %103, %105 : vector<8x256xf32>
    %c7 = arith.constant 7 : index
    %c0_38 = arith.constant 0 : index
    %c0_39 = arith.constant 0 : index
    %107 = vector.load %arg2[%c7, %c0_38, %c0_39] : memref<10x8x256xf32, #tpu.memory_space<vmem>>, vector<1x8x256xf32>
    %108 = vector.shape_cast %107 : vector<1x8x256xf32> to vector<8x256xf32>
    %109 = vector.shape_cast %106 : vector<8x256xf32> to vector<1x8x256xf32>
    tpu.vector_store %arg2[%c7, %c0_38, %c0_39], %109 {strides = array<i32>} : memref<10x8x256xf32, #tpu.memory_space<vmem>>, vector<1x8x256xf32>,
    %cst_40 = arith.constant 5.000000e-02 : f32
    %110 = vector.broadcast %cst_40 : f32 to vector<8x256xf32>
    %111 = arith.mulf %44, %110 : vector<8x256xf32>
    %cst_41 = arith.constant 0.949999988 : f32
    %112 = vector.broadcast %cst_41 : f32 to vector<8x256xf32>
    %113 = arith.mulf %45, %112 : vector<8x256xf32>
    %114 = arith.addf %111, %113 : vector<8x256xf32>
    %c8 = arith.constant 8 : index
    %c0_42 = arith.constant 0 : index
    %c0_43 = arith.constant 0 : index
    %115 = vector.load %arg2[%c8, %c0_42, %c0_43] : memref<10x8x256xf32, #tpu.memory_space<vmem>>, vector<1x8x256xf32>
    %116 = vector.shape_cast %115 : vector<1x8x256xf32> to vector<8x256xf32>
    %117 = vector.shape_cast %114 : vector<8x256xf32> to vector<1x8x256xf32>
    tpu.vector_store %arg2[%c8, %c0_42, %c0_43], %117 {strides = array<i32>} : memref<10x8x256xf32, #tpu.memory_space<vmem>>, vector<1x8x256xf32>,
    %cst_44 = arith.constant 3.500000e-01 : f32
    %118 = vector.broadcast %cst_44 : f32 to vector<8x256xf32>
    %119 = arith.mulf %45, %118 : vector<8x256xf32>
    %cst_45 = arith.constant 6.500000e-01 : f32
    %120 = vector.broadcast %cst_45 : f32 to vector<8x256xf32>
    %121 = arith.mulf %35, %120 : vector<8x256xf32>
    %122 = arith.addf %119, %121 : vector<8x256xf32>
    %c9 = arith.constant 9 : index
    %c0_46 = arith.constant 0 : index
    %c0_47 = arith.constant 0 : index
    %123 = vector.load %arg2[%c9, %c0_46, %c0_47] : memref<10x8x256xf32, #tpu.memory_space<vmem>>, vector<1x8x256xf32>
    %124 = vector.shape_cast %123 : vector<1x8x256xf32> to vector<8x256xf32>
    %125 = vector.shape_cast %122 : vector<8x256xf32> to vector<1x8x256xf32>
    tpu.vector_store %arg2[%c9, %c0_46, %c0_47], %125 {strides = array<i32>} : memref<10x8x256xf32, #tpu.memory_space<vmem>>, vector<1x8x256xf32>,
    return
  }
  func.func @transform_0(%arg0: i32) -> (i32, i32) {
    %c0_i32 = arith.constant 0 : i32
    %c0_i32_0 = arith.constant 0 : i32
    return %arg0, %c0_i32 : i32, i32
  }
  func.func @transform_1(%arg0: i32) -> (i32, i32, i32) {
    %c0_i32 = arith.constant 0 : i32
    %c0_i32_0 = arith.constant 0 : i32
    %c0_i32_1 = arith.constant 0 : i32
    return %c0_i32, %arg0, %c0_i32_0 : i32, i32, i32
  }
}

</mosaic_0001>

<llo_original>
// kernel: tpu_custom_call.1
$region0: #{tpu_custom_call.1}
  #allocation0 [shape = 'u32[]', space=smem, size = 0x4, offset = 0x4, fixed_abs, tag = 'smem constant byte address 0x4 - core index']
  #allocation1 [shape = 'u32[144,128]{1,0:T(1,128)}', space=vmem, size = 0x12000, scoped, tag = 'internal scratch']
  %s0 = inlined_call_operand.hbm [shape: f32[16,2048], index: 0, kind: input, shape index: {}]
  %s1 = inlined_call_operand.hbm [shape: f32[10,16,256], index: 1, kind: output, shape index: {}]
  %s2 = sld [smem:[#allocation0]]
  $region41: #{tpu_custom_call.1} parent=0
    _
  %s4 = ssub.s32 1, %s2
  %s5 = scalar_select 0, %s4, %s2
  $region1: #{tpu_custom_call.1} parent=0
    #allocation2 [shape = 'u8[131072]{0}', space=vmem, size = 0x20000, scoped, tag = 'input window, operand 0']
    #allocation3 [shape = 's32[2]{0}', space=sflag, size = 0x8, scoped, tag = 'scoped memory for tpu_custom_call.1']
    #allocation4 [shape = 's32[2]{0}', space=sflag, size = 0x8, scoped, tag = 'scoped memory for tpu_custom_call.1']
    #allocation5 [shape = 'u8[163840]{0}', space=vmem, size = 0x28000, scoped, tag = 'output window, operand 0']
    %6 = vsyncpa [#allocation3], 0
    %s7 = scalar_lea.sflag [#allocation3], 1
    %8 = vsyncpa %s7, 0
    %9 = vsyncpa [#allocation4], 0
    %s10 = scalar_lea.sflag [#allocation4], 1
    %11 = vsyncpa %s10, 0
    loop: start=0, step=1, limit=4
    $region2: #{tpu_custom_call.1} parent=1 // loop_pre_header
      _
    $region3: #{tpu_custom_call.1} parent=1 // loop_header
      %s13 = sphi 0, %s17
      %p14 = scmp.ge.s32.totalorder %s13, 4
      %s23 = sphi 0, %s25
      %s26 = sphi 0, %s23
      %s27 = sphi 0, %s26
      %s43 = sphi 0, %s27
      %s49 = sphi 0, %s51
      %s52 = sphi 0, %s49
      %s53 = sphi 0, %s52
      %s69 = sphi 0, %s53
    $region4: #{tpu_custom_call.1} parent=1 // loop_header_branch
      %16 = sbr.rel (%p14) target = $region8
    $region5: #{tpu_custom_call.1} parent=1 // loop_body
      %s18 = ssub.s32 %s13, 1
      %s19 = ssub.s32 %s13, 2
      %s20 = sadd.s32 %s13, 1
      %s21 = ssub.s32 %s13, %s20
      %p22 = scmp.eq.s32.totalorder %s21, 0
      %s24 = sadd.s32 %s23, 1
      %s25 = scalar_select %p22, %s23, %s24
      %p28 = pneg %p22
      %p29 = scmp.eq.s32.totalorder %s13, 1
      %p30 = por %p28, %p29
      %p31 = scmp.ne.s32.totalorder %s23, %s26
      %p32 = scmp.eq.s32.totalorder %s13, 0
      %p33 = por %p31, %p32
      %p34 = scmp.ne.s32.totalorder %s23, %s26
      %p35 = scmp.eq.s32.totalorder %s18, 1
      %p36 = por %p34, %p35
      %p37 = scmp.ne.s32.totalorder %s26, %s27
      %p38 = scmp.eq.s32.totalorder %s18, 0
      %p39 = por %p37, %p38
      %p40 = scmp.ne.s32.totalorder %s26, %s27
      %p41 = scmp.eq.s32.totalorder %s19, 1
      %p42 = por %p40, %p41
      %p44 = scmp.ne.s32.totalorder %s27, %s43
      %p45 = scmp.eq.s32.totalorder %s19, 0
      %p46 = por %p44, %p45
      %s47 = ssub.s32 %s13, %s20
      %p48 = scmp.eq.s32.totalorder %s47, 0
      %s50 = sadd.s32 %s49, 1
      %s51 = scalar_select %p48, %s49, %s50
      %p54 = pneg %p48
      %p55 = scmp.eq.s32.totalorder %s13, 1
      %p56 = por %p54, %p55
      %p57 = scmp.ne.s32.totalorder %s49, %s52
      %p58 = scmp.eq.s32.totalorder %s13, 0
      %p59 = por %p57, %p58
      %p60 = scmp.ne.s32.totalorder %s49, %s52
      %p61 = scmp.eq.s32.totalorder %s18, 1
      %p62 = por %p60, %p61
      %p63 = scmp.ne.s32.totalorder %s52, %s53
      %p64 = scmp.eq.s32.totalorder %s18, 0
      %p65 = por %p63, %p64
      %p66 = scmp.ne.s32.totalorder %s52, %s53
      %p67 = scmp.eq.s32.totalorder %s19, 1
      %p68 = por %p66, %p67
      %p70 = scmp.ne.s32.totalorder %s53, %s69
      %p71 = scmp.eq.s32.totalorder %s19, 0
      %p72 = por %p70, %p71
      %p73 = scmp.le.s32.totalorder 1, %s13
      %p74 = scmp.lt.s32.totalorder %s13, 3
      %p75 = pnand %p73, %p74
      %p76 = pneg %p75
      // Predicated region
      $region9: #{tpu_custom_call.1} parent=5 // pred_check
        _
      $region10: #{tpu_custom_call.1} parent=5 // pred_check_branch
        %78 = sbr.rel (%p75) target = $region12
      $region11: #{tpu_custom_call.1} parent=5 // pred_region
        %s79 = ssub.s32 %s13, 1
      $region12: #{tpu_custom_call.1} parent=5 // pred_fallthru
        _
      %p80 = scmp.lt.s32.totalorder %s13, 2
      // Predicated region
      $region13: #{tpu_custom_call.1} parent=5 // pred_check
        %p81 = pneg %p80
      $region14: #{tpu_custom_call.1} parent=5 // pred_check_branch
        %83 = sbr.rel (%p81) target = $region16
      $region15: #{tpu_custom_call.1} parent=5 // pred_region
        // Predicated region
        $region17: #{tpu_custom_call.1} parent=15 // pred_check
          %p84 = pneg %p33
        $region18: #{tpu_custom_call.1} parent=15 // pred_check_branch
          %86 = sbr.rel (%p84) target = $region20
        $region19: #{tpu_custom_call.1} parent=15 // pred_region
          %s87 = sand.u32 %s23, 1
          %s88 = scalar_lea.sflag [#allocation3], %s87
          %s89 = sand.u32 %s23, 1
          %s90 = smul.addr %s89, 128
          %s91 = scalar_lea.vmem [#allocation2], %s90
          %s93 = ssub.s32 2048, 2048
          %94 = vsyncadd %s88, %s93
          %s95 = smul.addr %s13, 16
          %s96 = smul.addr %s95, 128
          %s97 = scalar_lea.hbm %s0, %s96
          %s99 = sshll.u32 %s91, 4
          %s100 = int_to_ptr.vmem [resolvable:$true] %s99
          %102 = dma.hbm_to_vmem [thread:$0]  %s97, 2048, %s100, %s88
        $region20: #{tpu_custom_call.1} parent=15 // pred_fallthru
          _
      $region16: #{tpu_custom_call.1} parent=5 // pred_fallthru
        _
      %p103 = scmp.le.s32.totalorder 1, %s13
      %p104 = scmp.lt.s32.totalorder %s13, 3
      %p105 = pnand %p103, %p104
      %p106 = pneg %p105
      // Predicated region
      $region21: #{tpu_custom_call.1} parent=5 // pred_check
        _
      $region22: #{tpu_custom_call.1} parent=5 // pred_check_branch
        %108 = sbr.rel (%p105) target = $region24
      $region23: #{tpu_custom_call.1} parent=5 // pred_region
        %s109 = ssub.s32 %s13, 1
        %s110 = sand.u32 %s26, 1
        %s111 = scalar_lea.sflag [#allocation3], %s110
        %s112 = sand.u32 %s26, 1
        %s113 = smul.addr %s112, 128
        %s114 = scalar_lea.vmem [#allocation2], %s113
        // Predicated region
        $region25: #{tpu_custom_call.1} parent=23 // pred_check
          %p115 = pneg %p39
        $region26: #{tpu_custom_call.1} parent=23 // pred_check_branch
          %117 = sbr.rel (%p115) target = $region28
        $region27: #{tpu_custom_call.1} parent=23 // pred_region
          %118 = dma.done %s111, 2048
        $region28: #{tpu_custom_call.1} parent=23 // pred_fallthru
          _
        %s119 = sand.u32 %s26, 1
        %s120 = scalar_lea.sflag [#allocation3], %s119
        %s121 = sand.u32 %s26, 1
        %s122 = smul.addr %s121, 128
        %s123 = scalar_lea.vmem [#allocation2], %s122
        %p124 = pneg %p39
        %p125 = pneg %p36
        %p126 = pneg %p65
        %p127 = pneg %p62
        %s128 = sand.u32 %s52, 1
        %s129 = scalar_lea.sflag [#allocation4], %s128
        %s130 = sand.u32 %s52, 1
        %s131 = smul.addr %s130, 160
        %s132 = scalar_lea.vmem [#allocation5], %s131
        %v133 = vld [vmem:[%s114] sm:$0xff]
        %v134 = vld [vmem:[%s114 + $0x8] sm:$0xff]
        %v135 = vld [vmem:[%s114 + $0x10] sm:$0xff]
        %v136 = vld [vmem:[%s114 + $0x18] sm:$0xff]
        %v137 = vld [vmem:[%s114 + $0x20] sm:$0xff]
        %v138 = vld [vmem:[%s114 + $0x28] sm:$0xff]
        %v139 = vld [vmem:[%s114 + $0x30] sm:$0xff]
        %v140 = vld [vmem:[%s114 + $0x38] sm:$0xff]
        %v141 = vld [vmem:[%s114 + $0x40] sm:$0xff]
        %v142 = vld [vmem:[%s114 + $0x48] sm:$0xff]
        %v143 = vld [vmem:[%s114 + $0x50] sm:$0xff]
        %v144 = vld [vmem:[%s114 + $0x58] sm:$0xff]
        %v145 = vld [vmem:[%s114 + $0x60] sm:$0xff]
        %v146 = vld [vmem:[%s114 + $0x68] sm:$0xff]
        %v147 = vld [vmem:[%s114 + $0x70] sm:$0xff]
        %v148 = vld [vmem:[%s114 + $0x78] sm:$0xff]
        %v149 = vmin.f32 %v133, %v135
        %v150 = vmin.f32 %v134, %v136
        %v151 = vmax.f32 %v133, %v135
        %v152 = vmax.f32 %v134, %v136
        %v153 = vmin.f32 %v137, %v139
        %v154 = vmin.f32 %v138, %v140
        %v155 = vmax.f32 %v137, %v139
        %v156 = vmax.f32 %v138, %v140
        %v157 = vmin.f32 %v141, %v143
        %v158 = vmin.f32 %v142, %v144
        %v159 = vmax.f32 %v141, %v143
        %v160 = vmax.f32 %v142, %v144
        %v161 = vmin.f32 %v145, %v147
        %v162 = vmin.f32 %v146, %v148
        %v163 = vmax.f32 %v145, %v147
        %v164 = vmax.f32 %v146, %v148
        %v165 = vmin.f32 %v149, %v153
        %v166 = vmin.f32 %v150, %v154
        %v167 = vmax.f32 %v149, %v153
        %v168 = vmax.f32 %v150, %v154
        %v169 = vmin.f32 %v151, %v155
        %v170 = vmin.f32 %v152, %v156
        %v171 = vmax.f32 %v151, %v155
        %v172 = vmax.f32 %v152, %v156
        %v173 = vmin.f32 %v157, %v161
        %v174 = vmin.f32 %v158, %v162
        %v175 = vmax.f32 %v157, %v161
        %v176 = vmax.f32 %v158, %v162
        %v177 = vmin.f32 %v159, %v163
        %v178 = vmin.f32 %v160, %v164
        %v179 = vmax.f32 %v159, %v163
        %v180 = vmax.f32 %v160, %v164
        %v181 = vmin.f32 %v169, %v167
        %v182 = vmin.f32 %v170, %v168
        %v183 = vmax.f32 %v169, %v167
        %v184 = vmax.f32 %v170, %v168
        %v185 = vmin.f32 %v177, %v175
        %v186 = vmin.f32 %v178, %v176
        %v187 = vmax.f32 %v177, %v175
        %v188 = vmax.f32 %v178, %v176
        %v189 = vmin.f32 %v165, %v173
        %v190 = vmin.f32 %v166, %v174
        %v191 = vmax.f32 %v165, %v173
        %v192 = vmax.f32 %v166, %v174
        %v193 = vmin.f32 %v181, %v185
        %v194 = vmin.f32 %v182, %v186
        %v195 = vmax.f32 %v181, %v185
        %v196 = vmax.f32 %v182, %v186
        %v197 = vmin.f32 %v183, %v187
        %v198 = vmin.f32 %v184, %v188
        %v199 = vmax.f32 %v183, %v187
        %v200 = vmax.f32 %v184, %v188
        %v201 = vmin.f32 %v171, %v179
        %v202 = vmin.f32 %v172, %v180
        %v203 = vmax.f32 %v171, %v179
        %v204 = vmax.f32 %v172, %v180
        %v205 = vmin.f32 %v197, %v191
        %v206 = vmin.f32 %v198, %v192
        %v207 = vmax.f32 %v197, %v191
        %v208 = vmax.f32 %v198, %v192
        %v209 = vmin.f32 %v201, %v195
        %v210 = vmin.f32 %v202, %v196
        %v211 = vmax.f32 %v201, %v195
        %v212 = vmax.f32 %v202, %v196
        %v213 = vmin.f32 %v193, %v205
        %v214 = vmin.f32 %v194, %v206
        %v215 = vmax.f32 %v193, %v205
        %v216 = vmax.f32 %v194, %v206
        %v217 = vmin.f32 %v209, %v207
        %v218 = vmin.f32 %v210, %v208
        %v219 = vmax.f32 %v209, %v207
        %v220 = vmax.f32 %v210, %v208
        %v221 = vmin.f32 %v211, %v199
        %v222 = vmin.f32 %v212, %v200
        %v223 = vmax.f32 %v211, %v199
        %v224 = vmax.f32 %v212, %v200
        %v225 = vmul.f32 %v189, 0.65
        %v226 = vmul.f32 %v190, 0.65
        %v227 = vmul.f32 %v213, 0.35
        %v228 = vmul.f32 %v214, 0.35
        %v229 = vadd.f32 %v225, %v227
        %v230 = vadd.f32 %v226, %v228
        %231 = vst [vmem:[%s132] sm:$0xff] %v229
        %232 = vst [vmem:[%s132 + $0x8] sm:$0xff] %v230
        %v233 = vmul.f32 %v213, 0.95
        %v234 = vmul.f32 %v214, 0.95
        %v235 = vmul.f32 %v215, 0.05
        %v236 = vmul.f32 %v216, 0.05
        %v237 = vadd.f32 %v233, %v235
        %v238 = vadd.f32 %v234, %v236
        %s239 = scalar_lea.vmem %s132, 16 [#allocation5]
        %240 = vst [vmem:[%s239] sm:$0xff] %v237
        %241 = vst [vmem:[%s239 + $0x8] sm:$0xff] %v238
        %v242 = vmul.f32 %v213, 0.25
        %v243 = vmul.f32 %v214, 0.25
        %v244 = vmul.f32 %v215, 0.75
        %v245 = vmul.f32 %v216, 0.75
        %v246 = vadd.f32 %v242, %v244
        %v247 = vadd.f32 %v243, %v245
        %s248 = scalar_lea.vmem %s132, 32 [#allocation5]
        %249 = vst [vmem:[%s248] sm:$0xff] %v246
        %250 = vst [vmem:[%s248 + $0x8] sm:$0xff] %v247
        %v251 = vmul.f32 %v215, 0.55
        %v252 = vmul.f32 %v216, 0.55
        %v253 = vmul.f32 %v217, 0.45
        %v254 = vmul.f32 %v218, 0.45
        %v255 = vadd.f32 %v251, %v253
        %v256 = vadd.f32 %v252, %v254
        %s257 = scalar_lea.vmem %s132, 48 [#allocation5]
        %258 = vst [vmem:[%s257] sm:$0xff] %v255
        %259 = vst [vmem:[%s257 + $0x8] sm:$0xff] %v256
        %v260 = vmul.f32 %v217, 0.85
        %v261 = vmul.f32 %v218, 0.85
        %v262 = vmul.f32 %v219, 0.15
        %v263 = vmul.f32 %v220, 0.15
        %v264 = vadd.f32 %v260, %v262
        %v265 = vadd.f32 %v261, %v263
        %s266 = scalar_lea.vmem %s132, 64 [#allocation5]
        %267 = vst [vmem:[%s266] sm:$0xff] %v264
        %268 = vst [vmem:[%s266 + $0x8] sm:$0xff] %v265
        %v269 = vmul.f32 %v217, 0.15
        %v270 = vmul.f32 %v218, 0.15
        %v271 = vmul.f32 %v219, 0.85
        %v272 = vmul.f32 %v220, 0.85
        %v273 = vadd.f32 %v269, %v271
        %v274 = vadd.f32 %v270, %v272
        %s275 = scalar_lea.vmem %s132, 80 [#allocation5]
        %276 = vst [vmem:[%s275] sm:$0xff] %v273
        %277 = vst [vmem:[%s275 + $0x8] sm:$0xff] %v274
        %v278 = vmul.f32 %v219, 0.45
        %v279 = vmul.f32 %v220, 0.45
        %v280 = vmul.f32 %v221, 0.55
        %v281 = vmul.f32 %v222, 0.55
        %v282 = vadd.f32 %v278, %v280
        %v283 = vadd.f32 %v279, %v281
        %s284 = scalar_lea.vmem %s132, 96 [#allocation5]
        %285 = vst [vmem:[%s284] sm:$0xff] %v282
        %286 = vst [vmem:[%s284 + $0x8] sm:$0xff] %v283
        %v287 = vmul.f32 %v221, 0.75
        %v288 = vmul.f32 %v222, 0.75
        %v289 = vmul.f32 %v223, 0.25
        %v290 = vmul.f32 %v224, 0.25
        %v291 = vadd.f32 %v287, %v289
        %v292 = vadd.f32 %v288, %v290
        %s293 = scalar_lea.vmem %s132, 112 [#allocation5]
        %294 = vst [vmem:[%s293] sm:$0xff] %v291
        %295 = vst [vmem:[%s293 + $0x8] sm:$0xff] %v292
        %v296 = vmul.f32 %v221, 0.05
        %v297 = vmul.f32 %v222, 0.05
        %v298 = vmul.f32 %v223, 0.95
        %v299 = vmul.f32 %v224, 0.95
        %v300 = vadd.f32 %v296, %v298
        %v301 = vadd.f32 %v297, %v299
        %s302 = scalar_lea.vmem %s132, 128 [#allocation5]
        %303 = vst [vmem:[%s302] sm:$0xff] %v300
        %304 = vst [vmem:[%s302 + $0x8] sm:$0xff] %v301
        %v305 = vmul.f32 %v223, 0.35
        %v306 = vmul.f32 %v224, 0.35
        %v307 = vmul.f32 %v203, 0.65
        %v308 = vmul.f32 %v204, 0.65
        %v309 = vadd.f32 %v305, %v307
        %v310 = vadd.f32 %v306, %v308
        %s311 = scalar_lea.vmem %s132, 144 [#allocation5]
        %312 = vst [vmem:[%s311] sm:$0xff] %v309
        %313 = vst [vmem:[%s311 + $0x8] sm:$0xff] %v310
        %s314 = sand.u32 %s52, 1
        %s315 = scalar_lea.sflag [#allocation4], %s314
        %s316 = sand.u32 %s52, 1
        %s317 = smul.addr %s316, 160
        %s318 = scalar_lea.vmem [#allocation5], %s317
        // Predicated region
        $region29: #{tpu_custom_call.1} parent=23 // pred_check
          %p319 = pneg %p62
        $region30: #{tpu_custom_call.1} parent=23 // pred_check_branch
          %321 = sbr.rel (%p319) target = $region32
        $region31: #{tpu_custom_call.1} parent=23 // pred_region
          %s323 = ssub.s32 2560, 2560
          %324 = vsyncadd %s315, %s323
          %s325 = smul.addr %s18, 2
          %s326 = smul.addr %s325, 128
          %s327 = scalar_lea.hbm %s1, %s326
          %s328 = sshll.u32 %s318, 4
          %s329 = int_to_ptr.vmem [resolvable:$true] %s328
          %334 = dma.vmem_to_hbm [thread:$0]  %s329, 2560, %s327, %s315, 256, 512, 16
        $region32: #{tpu_custom_call.1} parent=23 // pred_fallthru
          _
      $region24: #{tpu_custom_call.1} parent=5 // pred_fallthru
        _
      %p335 = scmp.le.s32.totalorder 2, %s13
      // Predicated region
      $region33: #{tpu_custom_call.1} parent=5 // pred_check
        %p336 = pneg %p335
      $region34: #{tpu_custom_call.1} parent=5 // pred_check_branch
        %338 = sbr.rel (%p336) target = $region36
      $region35: #{tpu_custom_call.1} parent=5 // pred_region
        %s339 = ssub.s32 %s13, 2
        // Predicated region
        $region37: #{tpu_custom_call.1} parent=35 // pred_check
          %p340 = pneg %p68
        $region38: #{tpu_custom_call.1} parent=35 // pred_check_branch
          %342 = sbr.rel (%p340) target = $region40
        $region39: #{tpu_custom_call.1} parent=35 // pred_region
          %s343 = sand.u32 %s53, 1
          %s344 = scalar_lea.sflag [#allocation4], %s343
          %s345 = sand.u32 %s53, 1
          %s346 = smul.addr %s345, 160
          %s347 = scalar_lea.vmem [#allocation5], %s346
          %348 = dma.done %s344, 2560
        $region40: #{tpu_custom_call.1} parent=35 // pred_fallthru
          _
      $region36: #{tpu_custom_call.1} parent=5 // pred_fallthru
        _
    $region6: #{tpu_custom_call.1} parent=1 // loop_footer
      %s17 = sadd.s32 1, %s13
    $region7: #{tpu_custom_call.1} parent=1 // loop_footer_branch
      %12 = sbr.rel target = $region3
    $region8: #{tpu_custom_call.1} parent=1 // loop_exit
      _
    %349 = vsyncpa [#allocation3], 1
    %s350 = scalar_lea.sflag [#allocation3], 1
    %351 = vsyncpa %s350, 1
    %352 = vsyncpa [#allocation4], 1
    %s353 = scalar_lea.sflag [#allocation4], 1
    %354 = vsyncpa %s353, 1

</llo_original>
